<compile_context>
chip_gen: v5e
topology: v5e:2x2
jax: 0.10.0
libtpu: 0.0.40
codegen_flags: <defaults>
</compile_context>

<pallas_src>
import functools

import jax
import jax.numpy as jnp
from jax import lax
from jax.experimental import pallas as pl
from jax.experimental.pallas import tpu as pltpu


def _residual_block_kernel(x_ref, w1_ref, b1_ref, w2_ref, b2_ref, o_ref, *, W):
    # x_ref:  (Bblk, C, N) f32  channels-first images, N = H*W on the lane axis
    # w1_ref: (C, 9*C)     f32  3x3 conv weight, [out_c, tap*C + in_c], tap = ky*3+kx
    # b1_ref: (C, 1)       f32
    # w2_ref: (C, C)       f32  1x1 conv weight, [out_c, in_c]
    # b2_ref: (C, 1)       f32
    # o_ref:  (Bblk, C, N) f32
    Bblk, C, N = x_ref.shape

    # Column-boundary masks (tiny: one (1, N) iota + compares per grid step).
    lane = lax.broadcasted_iota(jnp.int32, (1, N), 1)
    col = lane % W
    not_left = col >= 1           # valid lanes for taps reading column w-1
    not_right = col <= W - 2      # valid lanes for taps reading column w+1

    w1 = w1_ref[...]              # (C, 9C)
    w2 = w2_ref[...]              # (C, C)
    b1 = b1_ref[...]              # (C, 1)
    b2 = b2_ref[...]              # (C, 1)

    for b in range(Bblk):
        x = x_ref[b]                              # (C, N)
        rx = jnp.maximum(x, 0.0)                  # first ReLU

        # Build the 9 shifted windows (zero fill at the flat ends handles row
        # over/underflow exactly; dx != 0 taps additionally need the column mask).
        wins = []
        for t in range(9):
            dy = t // 3 - 1
            dx = t % 3 - 1
            s = dy * W + dx                       # static flat lane shift
            if s == 0:
                win = rx
            elif s > 0:
                win = jnp.concatenate(
                    [rx[:, s:], jnp.zeros((C, s), rx.dtype)], axis=1)
            else:
                win = jnp.concatenate(
                    [jnp.zeros((C, -s), rx.dtype), rx[:, :N + s]], axis=1)
            if dx == -1:
                win = jnp.where(not_left, win, 0.0)
            elif dx == 1:
                win = jnp.where(not_right, win, 0.0)
            wins.append(win)

        im2col = jnp.concatenate(wins, axis=0)    # (9C, N), sublane-aligned stack

        # 3x3 conv as one long-K MXU matmul, bias, second ReLU.
        h = jnp.dot(w1, im2col, preferred_element_type=jnp.float32) + b1
        h = jnp.maximum(h, 0.0)
        # 1x1 conv, bias, residual add.
        y = jnp.dot(w2, h, preferred_element_type=jnp.float32) + b2
        o_ref[b] = (x + y).astype(o_ref.dtype)


def _pick_batch_block(B, per_image_bytes, target_bytes=1 << 20):
    """Largest divisor of B with tile <= target, keeping >= 2 grid steps if B >= 2."""
    best = 1
    for cand in range(1, B + 1):
        if B % cand:
            continue
        if cand * per_image_bytes > target_bytes:
            break
        if B >= 2 and B // cand < 2:
            break
        best = cand
    return best


def residual_block_forward(x, w1_oihw, b1, w2_oihw, b2):
    """x: (B, C, H, W) f32 NCHW; w1: (C, C, 3, 3) OIHW; w2: (C, C, 1, 1); biases (C,)."""
    B, C, H, W = x.shape
    N = H * W

    x_rows = x.reshape(B, C, N)                                  # free view of NCHW
    w1_mat = jnp.transpose(w1_oihw, (0, 2, 3, 1)).reshape(C, 9 * C)
    w2_mat = w2_oihw.reshape(C, C)
    b1c = b1.reshape(C, 1)
    b2c = b2.reshape(C, 1)

    itemsize = jnp.dtype(x.dtype).itemsize
    per_image_bytes = C * N * itemsize
    Bblk = _pick_batch_block(B, per_image_bytes)
    grid = (B // Bblk,)

    # VMEM budget: in/out blocks double-buffered, resident weights, im2col/window
    # temporaries + margin; clamped so it is valid on v5e (16 MiB scoped default)
    # and v7x (64 MiB physical VMEM).
    block_bytes = Bblk * per_image_bytes
    weight_bytes = (9 * C * C + C * C + 2 * C) * 4
    temp_bytes = Bblk * 20 * C * N * 4
    vmem_needed = 4 * block_bytes + 2 * weight_bytes + temp_bytes + (2 << 20)
    vmem_limit = int(min(max(vmem_needed, 8 * 2**20), 48 * 2**20))

    flops = 2 * B * N * (9 * C * C + C * C)
    bytes_accessed = 2 * B * C * N * itemsize + weight_bytes

    kernel = functools.partial(_residual_block_kernel, W=W)

    out_rows = pl.pallas_call(
        kernel,
        out_shape=jax.ShapeDtypeStruct((B, C, N), x.dtype),
        grid_spec=pltpu.PrefetchScalarGridSpec(
            num_scalar_prefetch=0,
            grid=grid,
            in_specs=[
                pl.BlockSpec((Bblk, C, N), lambda b: (b, 0, 0)),   # images
                pl.BlockSpec((C, 9 * C), lambda b: (0, 0)),        # conv3x3 (resident)
                pl.BlockSpec((C, 1), lambda b: (0, 0)),            # bias1   (resident)
                pl.BlockSpec((C, C), lambda b: (0, 0)),            # conv1x1 (resident)
                pl.BlockSpec((C, 1), lambda b: (0, 0)),            # bias2   (resident)
            ],
            out_specs=pl.BlockSpec((Bblk, C, N), lambda b: (b, 0, 0)),
        ),
        compiler_params=pltpu.CompilerParams(
            dimension_semantics=("parallel",),
            vmem_limit_bytes=vmem_limit,
        ),
        cost_estimate=pl.CostEstimate(
            flops=flops, transcendentals=0, bytes_accessed=bytes_accessed),
    )(x_rows, w1_mat, b1c, w2_mat, b2c)

    return out_rows.reshape(B, C, H, W)


def _reference_forward(x, w1_oihw, b1, w2_oihw, b2):
    """Pure-JAX reference matching the PyTorch module's forward values."""
    r = jnp.maximum(x, 0.0)
    y = lax.conv_general_dilated(
        r, w1_oihw, (1, 1), "SAME",
        dimension_numbers=("NCHW", "OIHW", "NCHW"),
        precision=lax.Precision.HIGHEST) + b1[None, :, None, None]
    y = jnp.maximum(y, 0.0)
    y = lax.conv_general_dilated(
        y, w2_oihw, (1, 1), "SAME",
        dimension_numbers=("NCHW", "OIHW", "NCHW"),
        precision=lax.Precision.HIGHEST) + b2[None, :, None, None]
    return x + y


if __name__ == "__main__":
    # Small shapes consistent with the module: in_channels=32, input (B=2, C=32, 16, 16).
    B, C, H, W = 2, 32, 16, 16

    key = jax.random.PRNGKey(0)
    kx, k1, kb1, k2, kb2 = jax.random.split(key, 5)
    x = jax.random.normal(kx, (B, C, H, W), jnp.float32)
    w1 = jax.random.normal(k1, (C, C, 3, 3), jnp.float32) * 0.1   # OIHW (PyTorch layout)
    b1 = jax.random.normal(kb1, (C,), jnp.float32) * 0.1
    w2 = jax.random.normal(k2, (C, C, 1, 1), jnp.float32) * 0.1   # OIHW
    b2 = jax.random.normal(kb2, (C,), jnp.float32) * 0.1

    out = residual_block_forward(x, w1, b1, w2, b2)
    jax.block_until_ready(out)

    ref = _reference_forward(x, w1, b1, w2, b2)
    assert out.shape == x.shape and out.dtype == x.dtype
    max_err = float(jnp.max(jnp.abs(out - ref)))
    assert jnp.allclose(out, ref, atol=2e-3, rtol=2e-3), max_err

    print("KERNEL_OK")
</pallas_src>

<mosaic_0001>
module attributes {stable_mosaic.version = 11 : i64} {
  func.func @_residual_block_kernel(%arg0: i32, %arg1: memref<1x32x256xf32, #tpu.memory_space<vmem>>, %arg2: memref<32x288xf32, #tpu.memory_space<vmem>>, %arg3: memref<32x1xf32, #tpu.memory_space<vmem>>, %arg4: memref<32x32xf32, #tpu.memory_space<vmem>>, %arg5: memref<32x1xf32, #tpu.memory_space<vmem>>, %arg6: memref<1x32x256xf32, #tpu.memory_space<vmem>>) attributes {dimension_semantics = [#tpu.dimension_semantics<parallel>], iteration_bounds = array<i64: 2>, scalar_prefetch = 0 : i64, scratch_operands = 0 : i64, tpu.core_type = #tpu.core_type<tc>, window_params = [{transform_indices = @transform_0, window_bounds = array<i64: 1, 32, 256>}, {pipeline_mode = #tpu.pipeline_mode<synchronous>, transform_indices = @transform_1, window_bounds = array<i64: 32, 288>}, {pipeline_mode = #tpu.pipeline_mode<synchronous>, transform_indices = @transform_2, window_bounds = array<i64: 32, 1>}, {pipeline_mode = #tpu.pipeline_mode<synchronous>, transform_indices = @transform_3, window_bounds = array<i64: 32, 32>}, {pipeline_mode = #tpu.pipeline_mode<synchronous>, transform_indices = @transform_4, window_bounds = array<i64: 32, 1>}, {transform_indices = @transform_5, window_bounds = array<i64: 1, 32, 256>}]} {
    %0 = tpu.iota {dimensions = array<i32: 1>} : vector<1x256xi32>
    %c16_i32 = arith.constant 16 : i32
    %c0_i32 = arith.constant 0 : i32
    %1 = arith.cmpi eq, %c16_i32, %c0_i32 : i32
    %c1_i32 = arith.constant 1 : i32
    %2 = arith.select %1, %c1_i32, %c16_i32 : i32
    %3 = vector.broadcast %2 : i32 to vector<1x256xi32>
    %4 = arith.remsi %0, %3 : vector<1x256xi32>
    %c0_i32_0 = arith.constant 0 : i32
    %5 = vector.broadcast %c0_i32_0 : i32 to vector<1x256xi32>
    %6 = arith.cmpi ne, %4, %5 : vector<1x256xi32>
    %c0_i32_1 = arith.constant 0 : i32
    %7 = vector.broadcast %c0_i32_1 : i32 to vector<1x256xi32>
    %8 = arith.cmpi slt, %4, %7 : vector<1x256xi32>
    %c0_i32_2 = arith.constant 0 : i32
    %9 = arith.cmpi slt, %2, %c0_i32_2 : i32
    %10 = vector.broadcast %9 : i1 to vector<1x256xi1>
    %11 = vector.broadcast %10 : vector<1x256xi1> to vector<1x256xi1>
    %12 = arith.xori %8, %11 : vector<1x256xi1>
    %13 = arith.andi %12, %6 : vector<1x256xi1>
    %14 = vector.broadcast %2 : i32 to vector<1x256xi32>
    %15 = arith.addi %4, %14 : vector<1x256xi32>
    %16 = arith.select %13, %15, %4 : vector<1x256xi1>, vector<1x256xi32>
    %c1_i32_3 = arith.constant 1 : i32
    %17 = vector.broadcast %c1_i32_3 : i32 to vector<1x256xi32>
    %18 = arith.cmpi sge, %16, %17 : vector<1x256xi32>
    %c14_i32 = arith.constant 14 : i32
    %19 = vector.broadcast %c14_i32 : i32 to vector<1x256xi32>
    %20 = arith.cmpi sle, %16, %19 : vector<1x256xi32>
    %c0 = arith.constant 0 : index
    %c0_4 = arith.constant 0 : index
    %21 = vector.load %arg2[%c0, %c0_4] : memref<32x288xf32, #tpu.memory_space<vmem>>, vector<32x288xf32>
    %c0_5 = arith.constant 0 : index
    %c0_6 = arith.constant 0 : index
    %22 = vector.load %arg4[%c0_5, %c0_6] : memref<32x32xf32, #tpu.memory_space<vmem>>, vector<32x32xf32>
    %c0_7 = arith.constant 0 : index
    %c0_8 = arith.constant 0 : index
    %23 = vector.load %arg3[%c0_7, %c0_8] : memref<32x1xf32, #tpu.memory_space<vmem>>, vector<32x1xf32>
    %c0_9 = arith.constant 0 : index
    %c0_10 = arith.constant 0 : index
    %24 = vector.load %arg5[%c0_9, %c0_10] : memref<32x1xf32, #tpu.memory_space<vmem>>, vector<32x1xf32>
    %c0_11 = arith.constant 0 : index
    %c0_12 = arith.constant 0 : index
    %c0_13 = arith.constant 0 : index
    %25 = vector.load %arg1[%c0_11, %c0_12, %c0_13] : memref<1x32x256xf32, #tpu.memory_space<vmem>>, vector<1x32x256xf32>
    %26 = vector.shape_cast %25 : vector<1x32x256xf32> to vector<32x256xf32>
    %cst = arith.constant 0.000000e+00 : f32
    %27 = vector.broadcast %cst : f32 to vector<32x256xf32>
    %28 = arith.maximumf %26, %27 : vector<32x256xf32>
    %cst_14 = arith.constant 0.000000e+00 : f32
    %29 = vector.broadcast %cst_14 : f32 to vector<32x17xf32>
    %30 = vector.extract_strided_slice %28 {offsets = [0, 0], sizes = [32, 239], strides = [1, 1]} : vector<32x256xf32> to vector<32x239xf32>
    %31 = tpu.concatenate %29, %30 in 1 : vector<32x17xf32>, vector<32x239xf32> -> vector<32x256xf32>
    %cst_15 = arith.constant 0.000000e+00 : f32
    %32 = vector.shape_cast %18 : vector<1x256xi1> to vector<1x256xi1>
    %33 = vector.broadcast %32 : vector<1x256xi1> to vector<32x256xi1>
    %34 = vector.broadcast %cst_15 : f32 to vector<32x256xf32>
    %35 = arith.select %33, %31, %34 : vector<32x256xi1>, vector<32x256xf32>
    %cst_16 = arith.constant 0.000000e+00 : f32
    %36 = vector.broadcast %cst_16 : f32 to vector<32x16xf32>
    %37 = vector.extract_strided_slice %28 {offsets = [0, 0], sizes = [32, 240], strides = [1, 1]} : vector<32x256xf32> to vector<32x240xf32>
    %38 = tpu.concatenate %36, %37 in 1 : vector<32x16xf32>, vector<32x240xf32> -> vector<32x256xf32>
    %cst_17 = arith.constant 0.000000e+00 : f32
    %39 = vector.broadcast %cst_17 : f32 to vector<32x15xf32>
    %40 = vector.extract_strided_slice %28 {offsets = [0, 0], sizes = [32, 241], strides = [1, 1]} : vector<32x256xf32> to vector<32x241xf32>
    %41 = tpu.concatenate %39, %40 in 1 : vector<32x15xf32>, vector<32x241xf32> -> vector<32x256xf32>
    %cst_18 = arith.constant 0.000000e+00 : f32
    %42 = vector.shape_cast %20 : vector<1x256xi1> to vector<1x256xi1>
    %43 = vector.broadcast %42 : vector<1x256xi1> to vector<32x256xi1>
    %44 = vector.broadcast %cst_18 : f32 to vector<32x256xf32>
    %45 = arith.select %43, %41, %44 : vector<32x256xi1>, vector<32x256xf32>
    %cst_19 = arith.constant 0.000000e+00 : f32
    %46 = vector.broadcast %cst_19 : f32 to vector<32x1xf32>
    %47 = vector.extract_strided_slice %28 {offsets = [0, 0], sizes = [32, 255], strides = [1, 1]} : vector<32x256xf32> to vector<32x255xf32>
    %48 = tpu.concatenate %46, %47 in 1 : vector<32x1xf32>, vector<32x255xf32> -> vector<32x256xf32>
    %cst_20 = arith.constant 0.000000e+00 : f32
    %49 = vector.shape_cast %18 : vector<1x256xi1> to vector<1x256xi1>
    %50 = vector.broadcast %49 : vector<1x256xi1> to vector<32x256xi1>
    %51 = vector.broadcast %cst_20 : f32 to vector<32x256xf32>
    %52 = arith.select %50, %48, %51 : vector<32x256xi1>, vector<32x256xf32>
    %53 = vector.extract_strided_slice %28 {offsets = [0, 1], sizes = [32, 255], strides = [1, 1]} : vector<32x256xf32> to vector<32x255xf32>
    %cst_21 = arith.constant 0.000000e+00 : f32
    %54 = vector.broadcast %cst_21 : f32 to vector<32x1xf32>
    %55 = tpu.concatenate %53, %54 in 1 : vector<32x255xf32>, vector<32x1xf32> -> vector<32x256xf32>
    %cst_22 = arith.constant 0.000000e+00 : f32
    %56 = vector.shape_cast %20 : vector<1x256xi1> to vector<1x256xi1>
    %57 = vector.broadcast %56 : vector<1x256xi1> to vector<32x256xi1>
    %58 = vector.broadcast %cst_22 : f32 to vector<32x256xf32>
    %59 = arith.select %57, %55, %58 : vector<32x256xi1>, vector<32x256xf32>
    %60 = vector.extract_strided_slice %28 {offsets = [0, 15], sizes = [32, 241], strides = [1, 1]} : vector<32x256xf32> to vector<32x241xf32>
    %cst_23 = arith.constant 0.000000e+00 : f32
    %61 = vector.broadcast %cst_23 : f32 to vector<32x15xf32>
    %62 = tpu.concatenate %60, %61 in 1 : vector<32x241xf32>, vector<32x15xf32> -> vector<32x256xf32>
    %cst_24 = arith.constant 0.000000e+00 : f32
    %63 = vector.shape_cast %18 : vector<1x256xi1> to vector<1x256xi1>
    %64 = vector.broadcast %63 : vector<1x256xi1> to vector<32x256xi1>
    %65 = vector.broadcast %cst_24 : f32 to vector<32x256xf32>
    %66 = arith.select %64, %62, %65 : vector<32x256xi1>, vector<32x256xf32>
    %67 = vector.extract_strided_slice %28 {offsets = [0, 16], sizes = [32, 240], strides = [1, 1]} : vector<32x256xf32> to vector<32x240xf32>
    %cst_25 = arith.constant 0.000000e+00 : f32
    %68 = vector.broadcast %cst_25 : f32 to vector<32x16xf32>
    %69 = tpu.concatenate %67, %68 in 1 : vector<32x240xf32>, vector<32x16xf32> -> vector<32x256xf32>
    %70 = vector.extract_strided_slice %28 {offsets = [0, 17], sizes = [32, 239], strides = [1, 1]} : vector<32x256xf32> to vector<32x239xf32>
    %cst_26 = arith.constant 0.000000e+00 : f32
    %71 = vector.broadcast %cst_26 : f32 to vector<32x17xf32>
    %72 = tpu.concatenate %70, %71 in 1 : vector<32x239xf32>, vector<32x17xf32> -> vector<32x256xf32>
    %cst_27 = arith.constant 0.000000e+00 : f32
    %73 = vector.shape_cast %20 : vector<1x256xi1> to vector<1x256xi1>
    %74 = vector.broadcast %73 : vector<1x256xi1> to vector<32x256xi1>
    %75 = vector.broadcast %cst_27 : f32 to vector<32x256xf32>
    %76 = arith.select %74, %72, %75 : vector<32x256xi1>, vector<32x256xf32>
    %77 = tpu.concatenate %35, %38, %45, %52, %28, %59, %66, %69, %76 in 0 : vector<32x256xf32>, vector<32x256xf32>, vector<32x256xf32>, vector<32x256xf32>, vector<32x256xf32>, vector<32x256xf32>, vector<32x256xf32>, vector<32x256xf32>, vector<32x256xf32> -> vector<288x256xf32>
    %cst_28 = arith.constant dense<0.000000e+00> : vector<32x256xf32>
    %78 = tpu.matmul %21, %77, %cst_28 {dimension_numbers = #tpu.dot_dimension_numbers<[1], [0], [0], [1], [0, 0, 1, 1], [], []>} : vector<32x288xf32>, vector<288x256xf32>, vector<32x256xf32> -> vector<32x256xf32>
    %79 = vector.broadcast %23 : vector<32x1xf32> to vector<32x256xf32>
    %80 = arith.addf %78, %79 : vector<32x256xf32>
    %cst_29 = arith.constant 0.000000e+00 : f32
    %81 = vector.broadcast %cst_29 : f32 to vector<32x256xf32>
    %82 = arith.maximumf %80, %81 : vector<32x256xf32>
    %cst_30 = arith.constant dense<0.000000e+00> : vector<32x256xf32>
    %83 = tpu.matmul %22, %82, %cst_30 {dimension_numbers = #tpu.dot_dimension_numbers<[1], [0], [0], [1], [0, 0, 1, 1], [], []>} : vector<32x32xf32>, vector<32x256xf32>, vector<32x256xf32> -> vector<32x256xf32>
    %84 = vector.broadcast %24 : vector<32x1xf32> to vector<32x256xf32>
    %85 = arith.addf %83, %84 : vector<32x256xf32>
    %86 = arith.addf %26, %85 : vector<32x256xf32>
    %c0_31 = arith.constant 0 : index
    %c0_32 = arith.constant 0 : index
    %c0_33 = arith.constant 0 : index
    %87 = vector.load %arg6[%c0_31, %c0_32, %c0_33] : memref<1x32x256xf32, #tpu.memory_space<vmem>>, vector<1x32x256xf32>
    %88 = vector.shape_cast %87 : vector<1x32x256xf32> to vector<32x256xf32>
    %89 = vector.shape_cast %86 : vector<32x256xf32> to vector<1x32x256xf32>
    tpu.vector_store %arg6[%c0_31, %c0_32, %c0_33], %89 {strides = array<i32>} : memref<1x32x256xf32, #tpu.memory_space<vmem>>, vector<1x32x256xf32>,
    return
  }
  func.func @transform_0(%arg0: i32) -> (i32, i32, i32) {
    %c0_i32 = arith.constant 0 : i32
    %c0_i32_0 = arith.constant 0 : i32
    %c0_i32_1 = arith.constant 0 : i32
    return %arg0, %c0_i32, %c0_i32_0 : i32, i32, i32
  }
  func.func @transform_1(%arg0: i32) -> (i32, i32) {
    %c0_i32 = arith.constant 0 : i32
    %c0_i32_0 = arith.constant 0 : i32
    %c0_i32_1 = arith.constant 0 : i32
    return %c0_i32, %c0_i32_0 : i32, i32
  }
  func.func @transform_2(%arg0: i32) -> (i32, i32) {
    %c0_i32 = arith.constant 0 : i32
    %c0_i32_0 = arith.constant 0 : i32
    %c0_i32_1 = arith.constant 0 : i32
    return %c0_i32, %c0_i32_0 : i32, i32
  }
  func.func @transform_3(%arg0: i32) -> (i32, i32) {
    %c0_i32 = arith.constant 0 : i32
    %c0_i32_0 = arith.constant 0 : i32
    %c0_i32_1 = arith.constant 0 : i32
    return %c0_i32, %c0_i32_0 : i32, i32
  }
  func.func @transform_4(%arg0: i32) -> (i32, i32) {
    %c0_i32 = arith.constant 0 : i32
    %c0_i32_0 = arith.constant 0 : i32
    %c0_i32_1 = arith.constant 0 : i32
    return %c0_i32, %c0_i32_0 : i32, i32
  }
  func.func @transform_5(%arg0: i32) -> (i32, i32, i32) {
    %c0_i32 = arith.constant 0 : i32
    %c0_i32_0 = arith.constant 0 : i32
    %c0_i32_1 = arith.constant 0 : i32
    return %arg0, %c0_i32, %c0_i32_0 : i32, i32, i32
  }
}

</mosaic_0001>

<llo_original>
// kernel: tpu_custom_call.1
$region0: #{tpu_custom_call.1}
  #allocation0 [shape = 'u32[]', space=smem, size = 0x4, offset = 0x4, fixed_abs, tag = 'smem constant byte address 0x4 - core index']
  #allocation1 [shape = 'u32[72,128]{1,0:T(1,128)}', space=vmem, size = 0x9000, scoped, tag = 'internal scratch']
  %s0 = inlined_call_operand.hbm [shape: f32[2,32,256], index: 0, kind: input, shape index: {}]
  %s1 = inlined_call_operand.hbm [shape: f32[32,288], index: 1, kind: input, shape index: {}]
  %s2 = inlined_call_operand.vmem [shape: f32[32,1], index: 2, kind: input, shape index: {}]
  %s3 = inlined_call_operand.vmem [shape: f32[32,32], index: 3, kind: input, shape index: {}]
  %s4 = inlined_call_operand.vmem [shape: f32[32,1], index: 4, kind: input, shape index: {}]
  %s5 = inlined_call_operand.hbm [shape: f32[2,32,256], index: 5, kind: output, shape index: {}]
  %s6 = sld [smem:[#allocation0]]
  $region61: #{tpu_custom_call.1} parent=0
    _
  %s8 = ssub.s32 1, %s6
  %s9 = scalar_select 0, %s8, %s6
  $region1: #{tpu_custom_call.1} parent=0
    #allocation2 [shape = 'u8[65536]{0}', space=vmem, size = 0x10000, scoped, tag = 'input window, operand 0']
    #allocation3 [shape = 's32[2]{0}', space=sflag, size = 0x8, scoped, tag = 'scoped memory for tpu_custom_call.1']
    #allocation4 [shape = 's32[2]{0}', space=sflag, size = 0x8, scoped, tag = 'scoped memory for tpu_custom_call.1']
    #allocation5 [shape = 'u8[49152]{0}', space=vmem, size = 0xc000, scoped, tag = 'input window, operand 1, single buffered']
    #allocation6 [shape = 's32[1]{0}', space=sflag, size = 0x4, scoped, tag = 'scoped memory for tpu_custom_call.1']
    #allocation7 [shape = 'u8[65536]{0}', space=vmem, size = 0x10000, scoped, tag = 'output window, operand 0']
    %10 = vsyncpa [#allocation3], 0
    %s11 = scalar_lea.sflag [#allocation3], 1
    %12 = vsyncpa %s11, 0
    %13 = vsyncpa [#allocation6], 0
    %14 = vsyncpa [#allocation4], 0
    %s15 = scalar_lea.sflag [#allocation4], 1
    %16 = vsyncpa %s15, 0
    loop: start=0, step=1, limit=4
    $region2: #{tpu_custom_call.1} parent=1 // loop_pre_header
      _
    $region3: #{tpu_custom_call.1} parent=1 // loop_header
      %s18 = sphi 0, %s22
      %p19 = scmp.ge.s32.totalorder %s18, 4
      %s28 = sphi 0, %s30
      %s31 = sphi 0, %s28
      %s32 = sphi 0, %s31
      %s48 = sphi 0, %s32
      %s52 = sphi 0, %s52
      %s54 = sphi 0, %s52
      %s55 = sphi 0, %s54
      %s69 = sphi 0, %s55
      %s73 = sphi 0, %s73
      %s75 = sphi 0, %s73
      %s76 = sphi 0, %s75
      %s90 = sphi 0, %s76
      %s94 = sphi 0, %s94
      %s96 = sphi 0, %s94
      %s97 = sphi 0, %s96
      %s111 = sphi 0, %s97
      %s115 = sphi 0, %s115
      %s117 = sphi 0, %s115
      %s118 = sphi 0, %s117
      %s132 = sphi 0, %s118
      %s138 = sphi 0, %s140
      %s141 = sphi 0, %s138
      %s142 = sphi 0, %s141
      %s158 = sphi 0, %s142
    $region4: #{tpu_custom_call.1} parent=1 // loop_header_branch
      %21 = sbr.rel (%p19) target = $region8
    $region5: #{tpu_custom_call.1} parent=1 // loop_body
      %s23 = ssub.s32 %s18, 1
      %s24 = ssub.s32 %s18, 2
      %s25 = sadd.s32 %s18, 1
      %s26 = ssub.s32 %s18, %s25
      %p27 = scmp.eq.s32.totalorder %s26, 0
      %s29 = sadd.s32 %s28, 1
      %s30 = scalar_select %p27, %s28, %s29
      %p33 = pneg %p27
      %p34 = scmp.eq.s32.totalorder %s18, 1
      %p35 = por %p33, %p34
      %p36 = scmp.ne.s32.totalorder %s28, %s31
      %p37 = scmp.eq.s32.totalorder %s18, 0
      %p38 = por %p36, %p37
      %p39 = scmp.ne.s32.totalorder %s28, %s31
      %p40 = scmp.eq.s32.totalorder %s23, 1
      %p41 = por %p39, %p40
      %p42 = scmp.ne.s32.totalorder %s31, %s32
      %p43 = scmp.eq.s32.totalorder %s23, 0
      %p44 = por %p42, %p43
      %p45 = scmp.ne.s32.totalorder %s31, %s32
      %p46 = scmp.eq.s32.totalorder %s24, 1
      %p47 = por %p45, %p46
      %p49 = scmp.ne.s32.totalorder %s32, %s48
      %p50 = scmp.eq.s32.totalorder %s24, 0
      %p51 = por %p49, %p50
      %s53 = sadd.s32 %s52, 1
      %p56 = scmp.eq.s32.totalorder %s18, 1
      %p57 = scmp.ne.s32.totalorder %s52, %s54
      %p58 = scmp.eq.s32.totalorder %s18, 0
      %p59 = por %p57, %p58
      %p60 = scmp.ne.s32.totalorder %s52, %s54
      %p61 = scmp.eq.s32.totalorder %s23, 1
      %p62 = por %p60, %p61
      %p63 = scmp.ne.s32.totalorder %s54, %s55
      %p64 = scmp.eq.s32.totalorder %s23, 0
      %p65 = por %p63, %p64
      %p66 = scmp.ne.s32.totalorder %s54, %s55
      %p67 = scmp.eq.s32.totalorder %s24, 1
      %p68 = por %p66, %p67
      %p70 = scmp.ne.s32.totalorder %s55, %s69
      %p71 = scmp.eq.s32.totalorder %s24, 0
      %p72 = por %p70, %p71
      %s74 = sadd.s32 %s73, 1
      %p77 = scmp.eq.s32.totalorder %s18, 1
      %p78 = scmp.ne.s32.totalorder %s73, %s75
      %p79 = scmp.eq.s32.totalorder %s18, 0
      %p80 = por %p78, %p79
      %p81 = scmp.ne.s32.totalorder %s73, %s75
      %p82 = scmp.eq.s32.totalorder %s23, 1
      %p83 = por %p81, %p82
      %p84 = scmp.ne.s32.totalorder %s75, %s76
      %p85 = scmp.eq.s32.totalorder %s23, 0
      %p86 = por %p84, %p85
      %p87 = scmp.ne.s32.totalorder %s75, %s76
      %p88 = scmp.eq.s32.totalorder %s24, 1
      %p89 = por %p87, %p88
      %p91 = scmp.ne.s32.totalorder %s76, %s90
      %p92 = scmp.eq.s32.totalorder %s24, 0
      %p93 = por %p91, %p92
      %s95 = sadd.s32 %s94, 1
      %p98 = scmp.eq.s32.totalorder %s18, 1
      %p99 = scmp.ne.s32.totalorder %s94, %s96
      %p100 = scmp.eq.s32.totalorder %s18, 0
      %p101 = por %p99, %p100
      %p102 = scmp.ne.s32.totalorder %s94, %s96
      %p103 = scmp.eq.s32.totalorder %s23, 1
      %p104 = por %p102, %p103
      %p105 = scmp.ne.s32.totalorder %s96, %s97
      %p106 = scmp.eq.s32.totalorder %s23, 0
      %p107 = por %p105, %p106
      %p108 = scmp.ne.s32.totalorder %s96, %s97
      %p109 = scmp.eq.s32.totalorder %s24, 1
      %p110 = por %p108, %p109
      %p112 = scmp.ne.s32.totalorder %s97, %s111
      %p113 = scmp.eq.s32.totalorder %s24, 0
      %p114 = por %p112, %p113
      %s116 = sadd.s32 %s115, 1
      %p119 = scmp.eq.s32.totalorder %s18, 1
      %p120 = scmp.ne.s32.totalorder %s115, %s117
      %p121 = scmp.eq.s32.totalorder %s18, 0
      %p122 = por %p120, %p121
      %p123 = scmp.ne.s32.totalorder %s115, %s117
      %p124 = scmp.eq.s32.totalorder %s23, 1
      %p125 = por %p123, %p124
      %p126 = scmp.ne.s32.totalorder %s117, %s118
      %p127 = scmp.eq.s32.totalorder %s23, 0
      %p128 = por %p126, %p127
      %p129 = scmp.ne.s32.totalorder %s117, %s118
      %p130 = scmp.eq.s32.totalorder %s24, 1
      %p131 = por %p129, %p130
      %p133 = scmp.ne.s32.totalorder %s118, %s132
      %p134 = scmp.eq.s32.totalorder %s24, 0
      %p135 = por %p133, %p134
      %s136 = ssub.s32 %s18, %s25
      %p137 = scmp.eq.s32.totalorder %s136, 0
      %s139 = sadd.s32 %s138, 1
      %s140 = scalar_select %p137, %s138, %s139
      %p143 = pneg %p137
      %p144 = scmp.eq.s32.totalorder %s18, 1
      %p145 = por %p143, %p144
      %p146 = scmp.ne.s32.totalorder %s138, %s141
      %p147 = scmp.eq.s32.totalorder %s18, 0
      %p148 = por %p146, %p147
      %p149 = scmp.ne.s32.totalorder %s138, %s141
      %p150 = scmp.eq.s32.totalorder %s23, 1
      %p151 = por %p149, %p150
      %p152 = scmp.ne.s32.totalorder %s141, %s142
      %p153 = scmp.eq.s32.totalorder %s23, 0
      %p154 = por %p152, %p153
      %p155 = scmp.ne.s32.totalorder %s141, %s142
      %p156 = scmp.eq.s32.totalorder %s24, 1
      %p157 = por %p155, %p156
      %p159 = scmp.ne.s32.totalorder %s142, %s158
      %p160 = scmp.eq.s32.totalorder %s24, 0
      %p161 = por %p159, %p160
      %p162 = scmp.le.s32.totalorder 1, %s18
      %p163 = scmp.lt.s32.totalorder %s18, 3
      %p164 = pnand %p162, %p163
      %p165 = pneg %p164
      // Predicated region
      $region9: #{tpu_custom_call.1} parent=5 // pred_check
        _
      $region10: #{tpu_custom_call.1} parent=5 // pred_check_branch
        %167 = sbr.rel (%p164) target = $region12
      $region11: #{tpu_custom_call.1} parent=5 // pred_region
        %s168 = ssub.s32 %s18, 1
        // Predicated region
        $region13: #{tpu_custom_call.1} parent=11 // pred_check
          %p169 = pneg %p65
        $region14: #{tpu_custom_call.1} parent=11 // pred_check_branch
          %171 = sbr.rel (%p169) target = $region16
        $region15: #{tpu_custom_call.1} parent=11 // pred_region
          %173 = vsyncadd [#allocation6], 0
          %s174 = sshll.u32 %s1, 4
          %s175 = int_to_ptr.hbm [resolvable:$true] %s174
          %s176 = sshll.u32 [#allocation5], 4
          %s177 = int_to_ptr.vmem [resolvable:$true] %s176
          %182 = dma.hbm_to_vmem [thread:$0]  %s175, 1536, %s177, [#allocation6], 384, 384, 24
        $region16: #{tpu_custom_call.1} parent=11 // pred_fallthru
          _
        // Predicated region
        $region17: #{tpu_custom_call.1} parent=11 // pred_check
          %p183 = pneg %p86
        $region18: #{tpu_custom_call.1} parent=11 // pred_check_branch
          %185 = sbr.rel (%p183) target = $region20
        $region19: #{tpu_custom_call.1} parent=11 // pred_region
          _
        $region20: #{tpu_custom_call.1} parent=11 // pred_fallthru
          _
        // Predicated region
        $region21: #{tpu_custom_call.1} parent=11 // pred_check
          %p186 = pneg %p107
        $region22: #{tpu_custom_call.1} parent=11 // pred_check_branch
          %188 = sbr.rel (%p186) target = $region24
        $region23: #{tpu_custom_call.1} parent=11 // pred_region
          _
        $region24: #{tpu_custom_call.1} parent=11 // pred_fallthru
          _
        // Predicated region
        $region25: #{tpu_custom_call.1} parent=11 // pred_check
          %p189 = pneg %p128
        $region26: #{tpu_custom_call.1} parent=11 // pred_check_branch
          %191 = sbr.rel (%p189) target = $region28
        $region27: #{tpu_custom_call.1} parent=11 // pred_region
          _
        $region28: #{tpu_custom_call.1} parent=11 // pred_fallthru
          _
      $region12: #{tpu_custom_call.1} parent=5 // pred_fallthru
        _
      %p192 = scmp.lt.s32.totalorder %s18, 2
      // Predicated region
      $region29: #{tpu_custom_call.1} parent=5 // pred_check
        %p193 = pneg %p192
      $region30: #{tpu_custom_call.1} parent=5 // pred_check_branch
        %195 = sbr.rel (%p193) target = $region32
      $region31: #{tpu_custom_call.1} parent=5 // pred_region
        // Predicated region
        $region33: #{tpu_custom_call.1} parent=31 // pred_check
          %p196 = pneg %p38
        $region34: #{tpu_custom_call.1} parent=31 // pred_check_branch
          %198 = sbr.rel (%p196) target = $region36
        $region35: #{tpu_custom_call.1} parent=31 // pred_region
          %s199 = sand.u32 %s28, 1
          %s200 = scalar_lea.sflag [#allocation3], %s199
          %s201 = sand.u32 %s28, 1
          %s202 = smul.addr %s201, 64
          %s203 = scalar_lea.vmem [#allocation2], %s202
          %205 = vsyncadd %s200, 0
          %s206 = smul.addr %s18, 8
          %s207 = smul.addr %s206, 8
          %s208 = scalar_lea.hbm %s0, %s207
          %s209 = sshll.u32 %s208, 4
          %s210 = int_to_ptr.hbm [resolvable:$true] %s209
          %s211 = sshll.u32 %s203, 4
          %s212 = int_to_ptr.vmem [resolvable:$true] %s211
          %217 = dma.hbm_to_vmem [thread:$0]  %s210, 1024, %s212, %s200, 256, 256, 16
        $region36: #{tpu_custom_call.1} parent=31 // pred_fallthru
          _
      $region32: #{tpu_custom_call.1} parent=5 // pred_fallthru
        _
      %p218 = scmp.le.s32.totalorder 1, %s18
      %p219 = scmp.lt.s32.totalorder %s18, 3
      %p220 = pnand %p218, %p219
      %p221 = pneg %p220
      // Predicated region
      $region37: #{tpu_custom_call.1} parent=5 // pred_check
        _
      $region38: #{tpu_custom_call.1} parent=5 // pred_check_branch
        %223 = sbr.rel (%p220) target = $region40
      $region39: #{tpu_custom_call.1} parent=5 // pred_region
        %s224 = ssub.s32 %s18, 1
        %s225 = sand.u32 %s31, 1
        %s226 = scalar_lea.sflag [#allocation3], %s225
        %s227 = sand.u32 %s31, 1
        %s228 = smul.addr %s227, 64
        %s229 = scalar_lea.vmem [#allocation2], %s228
        // Predicated region
        $region41: #{tpu_custom_call.1} parent=39 // pred_check
          %p230 = pneg %p44
        $region42: #{tpu_custom_call.1} parent=39 // pred_check_branch
          %232 = sbr.rel (%p230) target = $region44
        $region43: #{tpu_custom_call.1} parent=39 // pred_region
          %234 = dma.done %s226, 1024
        $region44: #{tpu_custom_call.1} parent=39 // pred_fallthru
          _
        // Predicated region
        $region45: #{tpu_custom_call.1} parent=39 // pred_check
          %p235 = pneg %p65
        $region46: #{tpu_custom_call.1} parent=39 // pred_check_branch
          %237 = sbr.rel (%p235) target = $region48
        $region47: #{tpu_custom_call.1} parent=39 // pred_region
          %239 = dma.done [#allocation6], 1536
        $region48: #{tpu_custom_call.1} parent=39 // pred_fallthru
          _
        %s240 = sand.u32 %s31, 1
        %s241 = scalar_lea.sflag [#allocation3], %s240
        %s242 = sand.u32 %s31, 1
        %s243 = smul.addr %s242, 64
        %s244 = scalar_lea.vmem [#allocation2], %s243
        %p245 = pneg %p44
        %p246 = pneg %p41
        %p247 = pneg %p65
        %p248 = pneg %p62
        %p249 = pneg %p86
        %p250 = pneg %p83
        %p251 = pneg %p107
        %p252 = pneg %p104
        %p253 = pneg %p128
        %p254 = pneg %p125
        %p255 = pneg %p154
        %p256 = pneg %p151
        %s257 = sand.u32 %s141, 1
        %s258 = scalar_lea.sflag [#allocation4], %s257
        %s259 = sand.u32 %s141, 1
        %s260 = smul.addr %s259, 64
        %s261 = scalar_lea.vmem [#allocation7], %s260
        %v262 = vlaneseq
        %v263 = vand.u32 %v262, 127
        %v264 = vadd.s32 %v263, 128
        %vm265 = vcmp.lt.s32.totalorder %v263, 0
        %v266 = vsub.s32 0, %v263
        %v267 = vsel %vm265, %v266, %v263
        %v268 = vshrl.u32 %v267, 4
        %v269 = vand.u32 %v267, 15
        %v270 = vsub.s32 0, %v269
        %v271 = vsel %vm265, %v270, %v269
        %vm272 = vcmp.lt.s32.totalorder %v264, 0
        %v273 = vsub.s32 0, %v264
        %v274 = vsel %vm272, %v273, %v264
        %v275 = vshrl.u32 %v274, 4
        %v276 = vand.u32 %v274, 15
        %v277 = vsub.s32 0, %v276
        %v278 = vsel %vm272, %v277, %v276
        %vm279 = vcmp.ne.s32.totalorder %v271, 0
        %vm280 = vcmp.ne.s32.totalorder %v278, 0
        %vm281 = vcmp.lt.s32.totalorder %v271, 0
        %vm282 = vcmp.lt.s32.totalorder %v278, 0
        %vm283 = vmand %vm281, %vm279
        %vm284 = vmand %vm282, %vm280
        %v285 = vadd.s32 %v271, 16
        %v286 = vadd.s32 %v278, 16
        %v287 = vsel %vm283, %v285, %v271
        %v288 = vsel %vm284, %v286, %v278
        %vm289 = vcmp.ge.s32.totalorder %v287, 1
        %vm290 = vcmp.ge.s32.totalorder %v288, 1
        %vm291 = vcmp.le.s32.totalorder %v287, 14
        %vm292 = vcmp.le.s32.totalorder %v288, 14
        %v293 = vld [vmem:[#allocation5] sm:$0xff]
        %v294 = vld [vmem:[#allocation5 + $0x8] sm:$0xff]
        %v295 = vld [vmem:[#allocation5 + $0x10] sm:$0xff]
        %v296 = vld [vmem:[#allocation5 + $0x18] sm:$0xff]
        %v297 = vld [vmem:[#allocation5 + $0x20] sm:$0xff]
        %v298 = vld [vmem:[#allocation5 + $0x28] sm:$0xff]
        %v299 = vld [vmem:[#allocation5 + $0x30] sm:$0xff]
        %v300 = vld [vmem:[#allocation5 + $0x38] sm:$0xff]
        %v301 = vld [vmem:[#allocation5 + $0x40] sm:$0xff]
        %v302 = vld [vmem:[#allocation5 + $0x48] sm:$0xff]
        %v303 = vld [vmem:[#allocation5 + $0x50] sm:$0xff]
        %v304 = vld [vmem:[#allocation5 + $0x58] sm:$0xff]
        %v305 = vld [vmem:[%s3] sm:$0xff]
        %v306 = vld [vmem:[%s3 + $0x8] sm:$0xff]
        %v307 = vld [vmem:[%s3 + $0x10] sm:$0xff]
        %v308 = vld [vmem:[%s3 + $0x18] sm:$0xff]
        %v309 = vld [vmem:[%s2] sm:$0xff]
        %v310 = vld [vmem:[%s2 + $0x8] sm:$0xff]
        %v311 = vld [vmem:[%s2 + $0x10] sm:$0xff]
        %v312 = vld [vmem:[%s2 + $0x18] sm:$0xff]
        %v313 = vld [vmem:[%s4] sm:$0xff]
        %v314 = vld [vmem:[%s4 + $0x8] sm:$0xff]
        %v315 = vld [vmem:[%s4 + $0x10] sm:$0xff]
        %v316 = vld [vmem:[%s4 + $0x18] sm:$0xff]
        %v317 = vld [vmem:[%s229] sm:$0xff]
        %v318 = vld [vmem:[%s229 + $0x8] sm:$0xff]
        %v319 = vld [vmem:[%s229 + $0x10] sm:$0xff]
        %v320 = vld [vmem:[%s229 + $0x18] sm:$0xff]
        %v321 = vld [vmem:[%s229 + $0x20] sm:$0xff]
        %v322 = vld [vmem:[%s229 + $0x28] sm:$0xff]
        %v323 = vld [vmem:[%s229 + $0x30] sm:$0xff]
        %v324 = vld [vmem:[%s229 + $0x38] sm:$0xff]
        %v325 = vmax.f32 %v317, 0.0
        %v326 = vmax.f32 %v318, 0.0
        %v327 = vmax.f32 %v319, 0.0
        %v328 = vmax.f32 %v320, 0.0
        %v329 = vmax.f32 %v321, 0.0
        %v330 = vmax.f32 %v322, 0.0
        %v331 = vmax.f32 %v323, 0.0
        %v332 = vmax.f32 %v324, 0.0
        %341 = vrot.lane.b32.xlu0 %v325, 17
        %v342 = vpop.permute.xlu0 %341
        %343 = vrot.lane.b32.xlu0 %v326, 17
        %v344 = vpop.permute.xlu0 %343
        %345 = vrot.lane.b32.xlu0 %v327, 17
        %v346 = vpop.permute.xlu0 %345
        %347 = vrot.lane.b32.xlu0 %v328, 17
        %v348 = vpop.permute.xlu0 %347
        %349 = vrot.lane.b32.xlu0 %v329, 17
        %v350 = vpop.permute.xlu0 %349
        %351 = vrot.lane.b32.xlu0 %v330, 17
        %v352 = vpop.permute.xlu0 %351
        %353 = vrot.lane.b32.xlu0 %v331, 17
        %v354 = vpop.permute.xlu0 %353
        %355 = vrot.lane.b32.xlu0 %v332, 17
        %v356 = vpop.permute.xlu0 %355
        %vm357 = vcmask 138240
        %v358 = vsel %vm357, %v342, %v344
        %v359 = vsel %vm357, %v346, %v348
        %v360 = vsel %vm357, %v350, %v352
        %v361 = vsel %vm357, %v354, %v356
        %v370 = vsel %vm357, 0.0, %v342
        %v371 = vsel %vm357, 0.0, %v346
        %v372 = vsel %vm357, 0.0, %v350
        %v373 = vsel %vm357, 0.0, %v354
        %v374 = vsel %vm289, 1, 0
        %v375 = vsel %vm290, 1, 0
        %vm376 = vcmp.eq.s32.totalorder %v374, 1
        %vm377 = vcmp.eq.s32.totalorder %v375, 1
        %v378 = vsel %vm376, %v370, 0.0
        %v379 = vsel %vm377, %v358, 0.0
        %v380 = vsel %vm376, %v371, 0.0
        %v381 = vsel %vm377, %v359, 0.0
        %v382 = vsel %vm376, %v372, 0.0
        %v383 = vsel %vm377, %v360, 0.0
        %v384 = vsel %vm376, %v373, 0.0
        %v385 = vsel %vm377, %v361, 0.0
        %386 = vrot.lane.b32.xlu0 %v325, 16
        %v387 = vpop.permute.xlu0 %386
        %388 = vrot.lane.b32.xlu0 %v326, 16
        %v389 = vpop.permute.xlu0 %388
        %390 = vrot.lane.b32.xlu0 %v327, 16
        %v391 = vpop.permute.xlu0 %390
        %392 = vrot.lane.b32.xlu0 %v328, 16
        %v393 = vpop.permute.xlu0 %392
        %394 = vrot.lane.b32.xlu0 %v329, 16
        %v395 = vpop.permute.xlu0 %394
        %396 = vrot.lane.b32.xlu0 %v330, 16
        %v397 = vpop.permute.xlu0 %396
        %398 = vrot.lane.b32.xlu0 %v331, 16
        %v399 = vpop.permute.xlu0 %398
        %400 = vrot.lane.b32.xlu0 %v332, 16
        %v401 = vpop.permute.xlu0 %400
        %vm402 = vcmask 130048
        %v403 = vsel %vm402, %v387, %v389
        %v404 = vsel %vm402, %v391, %v393
        %v405 = vsel %vm402, %v395, %v397
        %v406 = vsel %vm402, %v399, %v401
        %v415 = vsel %vm402, 0.0, %v387
        %v416 = vsel %vm402, 0.0, %v391
        %v417 = vsel %vm402, 0.0, %v395
        %v418 = vsel %vm402, 0.0, %v399
        %419 = vrot.lane.b32.xlu0 %v325, 15
        %v420 = vpop.permute.xlu0 %419
        %421 = vrot.lane.b32.xlu0 %v326, 15
        %v422 = vpop.permute.xlu0 %421
        %423 = vrot.lane.b32.xlu0 %v327, 15
        %v424 = vpop.permute.xlu0 %423
        %425 = vrot.lane.b32.xlu0 %v328, 15
        %v426 = vpop.permute.xlu0 %425
        %427 = vrot.lane.b32.xlu0 %v329, 15
        %v428 = vpop.permute.xlu0 %427
        %429 = vrot.lane.b32.xlu0 %v330, 15
        %v430 = vpop.permute.xlu0 %429
        %431 = vrot.lane.b32.xlu0 %v331, 15
        %v432 = vpop.permute.xlu0 %431
        %433 = vrot.lane.b32.xlu0 %v332, 15
        %v434 = vpop.permute.xlu0 %433
        %vm435 = vcmask 121856
        %v436 = vsel %vm435, %v420, %v422
        %v437 = vsel %vm435, %v424, %v426
        %v438 = vsel %vm435, %v428, %v430
        %v439 = vsel %vm435, %v432, %v434
        %v448 = vsel %vm435, 0.0, %v420
        %v449 = vsel %vm435, 0.0, %v424
        %v450 = vsel %vm435, 0.0, %v428
        %v451 = vsel %vm435, 0.0, %v432
        %v452 = vsel %vm291, 1, 0
        %v453 = vsel %vm292, 1, 0
        %vm454 = vcmp.eq.s32.totalorder %v452, 1
        %vm455 = vcmp.eq.s32.totalorder %v453, 1
        %v456 = vsel %vm454, %v448, 0.0
        %v457 = vsel %vm455, %v436, 0.0
        %v458 = vsel %vm454, %v449, 0.0
        %v459 = vsel %vm455, %v437, 0.0
        %v460 = vsel %vm454, %v450, 0.0
        %v461 = vsel %vm455, %v438, 0.0
        %v462 = vsel %vm454, %v451, 0.0
        %v463 = vsel %vm455, %v439, 0.0
        %464 = vrot.lane.b32.xlu0 %v325, 1
        %v465 = vpop.permute.xlu0 %464
        %466 = vrot.lane.b32.xlu0 %v326, 1
        %v467 = vpop.permute.xlu0 %466
        %468 = vrot.lane.b32.xlu0 %v327, 1
        %v469 = vpop.permute.xlu0 %468
        %470 = vrot.lane.b32.xlu0 %v328, 1
        %v471 = vpop.permute.xlu0 %470
        %472 = vrot.lane.b32.xlu0 %v329, 1
        %v473 = vpop.permute.xlu0 %472
        %474 = vrot.lane.b32.xlu0 %v330, 1
        %v475 = vpop.permute.xlu0 %474
        %476 = vrot.lane.b32.xlu0 %v331, 1
        %v477 = vpop.permute.xlu0 %476
        %478 = vrot.lane.b32.xlu0 %v332, 1
        %v479 = vpop.permute.xlu0 %478
        %vm480 = vcmask 7168
        %v481 = vsel %vm480, %v465, %v467
        %v482 = vsel %vm480, %v469, %v471
        %v483 = vsel %vm480, %v473, %v475
        %v484 = vsel %vm480, %v477, %v479
        %v493 = vsel %vm480, 0.0, %v465
        %v494 = vsel %vm480, 0.0, %v469
        %v495 = vsel %vm480, 0.0, %v473
        %v496 = vsel %vm480, 0.0, %v477
        %v497 = vsel %vm376, %v493, 0.0
        %v498 = vsel %vm377, %v481, 0.0
        %v499 = vsel %vm376, %v494, 0.0
        %v500 = vsel %vm377, %v482, 0.0
        %v501 = vsel %vm376, %v495, 0.0
        %v502 = vsel %vm377, %v483, 0.0
        %v503 = vsel %vm376, %v496, 0.0
        %v504 = vsel %vm377, %v484, 0.0
        %505 = vrot.lane.b32.xlu0 %v325, 127
        %v506 = vpop.permute.xlu0 %505
        %507 = vrot.lane.b32.xlu0 %v326, 127
        %v508 = vpop.permute.xlu0 %507
        %509 = vrot.lane.b32.xlu0 %v327, 127
        %v510 = vpop.permute.xlu0 %509
        %511 = vrot.lane.b32.xlu0 %v328, 127
        %v512 = vpop.permute.xlu0 %511
        %513 = vrot.lane.b32.xlu0 %v329, 127
        %v514 = vpop.permute.xlu0 %513
        %515 = vrot.lane.b32.xlu0 %v330, 127
        %v516 = vpop.permute.xlu0 %515
        %517 = vrot.lane.b32.xlu0 %v331, 127
        %v518 = vpop.permute.xlu0 %517
        %519 = vrot.lane.b32.xlu0 %v332, 127
        %v520 = vpop.permute.xlu0 %519
        %vm521 = vcmask 1039360
        %v522 = vsel %vm521, %v506, %v508
        %v523 = vsel %vm521, %v510, %v512
        %v524 = vsel %vm521, %v514, %v516
        %v525 = vsel %vm521, %v518, %v520
        %v534 = vsel %vm521, %v508, 0.0
        %v535 = vsel %vm521, %v512, 0.0
        %v536 = vsel %vm521, %v516, 0.0
        %v537 = vsel %vm521, %v520, 0.0
        %v538 = vsel %vm454, %v522, 0.0
        %v539 = vsel %vm455, %v534, 0.0
        %v540 = vsel %vm454, %v523, 0.0
        %v541 = vsel %vm455, %v535, 0.0
        %v542 = vsel %vm454, %v524, 0.0
        %v543 = vsel %vm455, %v536, 0.0
        %v544 = vsel %vm454, %v525, 0.0
        %v545 = vsel %vm455, %v537, 0.0
        %546 = vrot.lane.b32.xlu0 %v325, 113
        %v547 = vpop.permute.xlu0 %546
        %548 = vrot.lane.b32.xlu0 %v326, 113
        %v549 = vpop.permute.xlu0 %548
        %550 = vrot.lane.b32.xlu0 %v327, 113
        %v551 = vpop.permute.xlu0 %550
        %552 = vrot.lane.b32.xlu0 %v328, 113
        %v553 = vpop.permute.xlu0 %552
        %554 = vrot.lane.b32.xlu0 %v329, 113
        %v555 = vpop.permute.xlu0 %554
        %556 = vrot.lane.b32.xlu0 %v330, 113
        %v557 = vpop.permute.xlu0 %556
        %558 = vrot.lane.b32.xlu0 %v331, 113
        %v559 = vpop.permute.xlu0 %558
        %560 = vrot.lane.b32.xlu0 %v332, 113
        %v561 = vpop.permute.xlu0 %560
        %vm562 = vcmask 924672
        %v563 = vsel %vm562, %v547, %v549
        %v564 = vsel %vm562, %v551, %v553
        %v565 = vsel %vm562, %v555, %v557
        %v566 = vsel %vm562, %v559, %v561
        %v575 = vsel %vm562, %v549, 0.0
        %v576 = vsel %vm562, %v553, 0.0
        %v577 = vsel %vm562, %v557, 0.0
        %v578 = vsel %vm562, %v561, 0.0
        %v579 = vsel %vm376, %v563, 0.0
        %v580 = vsel %vm377, %v575, 0.0
        %v581 = vsel %vm376, %v564, 0.0
        %v582 = vsel %vm377, %v576, 0.0
        %v583 = vsel %vm376, %v565, 0.0
        %v584 = vsel %vm377, %v577, 0.0
        %v585 = vsel %vm376, %v566, 0.0
        %v586 = vsel %vm377, %v578, 0.0
        %587 = vrot.lane.b32.xlu0 %v325, 112
        %v588 = vpop.permute.xlu0 %587
        %589 = vrot.lane.b32.xlu0 %v326, 112
        %v590 = vpop.permute.xlu0 %589
        %591 = vrot.lane.b32.xlu0 %v327, 112
        %v592 = vpop.permute.xlu0 %591
        %593 = vrot.lane.b32.xlu0 %v328, 112
        %v594 = vpop.permute.xlu0 %593
        %595 = vrot.lane.b32.xlu0 %v329, 112
        %v596 = vpop.permute.xlu0 %595
        %597 = vrot.lane.b32.xlu0 %v330, 112
        %v598 = vpop.permute.xlu0 %597
        %599 = vrot.lane.b32.xlu0 %v331, 112
        %v600 = vpop.permute.xlu0 %599
        %601 = vrot.lane.b32.xlu0 %v332, 112
        %v602 = vpop.permute.xlu0 %601
        %vm603 = vcmask 916480
        %v604 = vsel %vm603, %v588, %v590
        %v605 = vsel %vm603, %v592, %v594
        %v606 = vsel %vm603, %v596, %v598
        %v607 = vsel %vm603, %v600, %v602
        %v616 = vsel %vm603, %v590, 0.0
        %v617 = vsel %vm603, %v594, 0.0
        %v618 = vsel %vm603, %v598, 0.0
        %v619 = vsel %vm603, %v602, 0.0
        %620 = vrot.lane.b32.xlu0 %v325, 111
        %v621 = vpop.permute.xlu0 %620
        %622 = vrot.lane.b32.xlu0 %v326, 111
        %v623 = vpop.permute.xlu0 %622
        %624 = vrot.lane.b32.xlu0 %v327, 111
        %v625 = vpop.permute.xlu0 %624
        %626 = vrot.lane.b32.xlu0 %v328, 111
        %v627 = vpop.permute.xlu0 %626
        %628 = vrot.lane.b32.xlu0 %v329, 111
        %v629 = vpop.permute.xlu0 %628
        %630 = vrot.lane.b32.xlu0 %v330, 111
        %v631 = vpop.permute.xlu0 %630
        %632 = vrot.lane.b32.xlu0 %v331, 111
        %v633 = vpop.permute.xlu0 %632
        %634 = vrot.lane.b32.xlu0 %v332, 111
        %v635 = vpop.permute.xlu0 %634
        %vm636 = vcmask 908288
        %v637 = vsel %vm636, %v621, %v623
        %v638 = vsel %vm636, %v625, %v627
        %v639 = vsel %vm636, %v629, %v631
        %v640 = vsel %vm636, %v633, %v635
        %v649 = vsel %vm636, %v623, 0.0
        %v650 = vsel %vm636, %v627, 0.0
        %v651 = vsel %vm636, %v631, 0.0
        %v652 = vsel %vm636, %v635, 0.0
        %v653 = vsel %vm454, %v637, 0.0
        %v654 = vsel %vm455, %v649, 0.0
        %v655 = vsel %vm454, %v638, 0.0
        %v656 = vsel %vm455, %v650, 0.0
        %v657 = vsel %vm454, %v639, 0.0
        %v658 = vsel %vm455, %v651, 0.0
        %v659 = vsel %vm454, %v640, 0.0
        %v660 = vsel %vm455, %v652, 0.0
        %662 = vset.pattern.permute.xlu0 0
        %663 = vperm.xlu0 %662, %v309
        %v664 = vpop.permute.xlu0 %663
        %667 = vset.pattern.permute.xlu0 0
        %668 = vperm.xlu0 %667, %v310
        %v669 = vpop.permute.xlu0 %668
        %672 = vset.pattern.permute.xlu0 0
        %673 = vperm.xlu0 %672, %v311
        %v674 = vpop.permute.xlu0 %673
        %677 = vset.pattern.permute.xlu0 0
        %678 = vperm.xlu0 %677, %v312
        %v679 = vpop.permute.xlu0 %678
        %vm681 = vcmask 261120
        %v683 = vsel %vm681, %v295, 0
        %v686 = vsel %vm681, %v298, 0
        %v689 = vsel %vm681, %v301, 0
        %v692 = vsel %vm681, %v304, 0
        %694 = vmatpush.msra.mxu0 %v503
        %695 = vmatpush.msra.mxu0 %v501
        %696 = vmatpush.msra.mxu0 %v499
        %697 = vmatpush.msra.mxu0 %v497
        %698 = vmatpush.msra.mxu0 %v462
        %699 = vmatpush.msra.mxu0 %v460
        %700 = vmatpush.msra.mxu0 %v458
        %701 = vmatpush.msra.mxu0 %v456
        %702 = vmatpush.msra.mxu0 %v418
        %703 = vmatpush.msra.mxu0 %v417
        %704 = vmatpush.msra.mxu0 %v416
        %705 = vmatpush.msra.mxu0 %v415
        %706 = vmatpush.msra.mxu0 %v384
        %707 = vmatpush.msra.mxu0 %v382
        %708 = vmatpush.msra.mxu0 %v380
        %709 = vmatpush.msra.mxu0 %v378
        %710 = vmatmul.f32.gmra.mxu0 %v293
        %v711 = vpop.f32.mrf.mxu0
        %v712 = vadd.f32 %v664, %v711
        %713 = vmatmul.f32.gmra.mxu0 %v296
        %v714 = vpop.f32.mrf.mxu0
        %v715 = vadd.f32 %v669, %v714
        %716 = vmatmul.f32.gmra.mxu0 %v299
        %v717 = vpop.f32.mrf.mxu0
        %v718 = vadd.f32 %v674, %v717
        %719 = vmatmul.f32.gmra.mxu0 %v302
        %v720 = vpop.f32.mrf.mxu0
        %v721 = vadd.f32 %v679, %v720
        %722 = vdwg.mxu0
        %723 = vmatpush.msra.mxu0 %v607
        %724 = vmatpush.msra.mxu0 %v606
        %725 = vmatpush.msra.mxu0 %v605
        %726 = vmatpush.msra.mxu0 %v604
        %727 = vmatpush.msra.mxu0 %v585
        %728 = vmatpush.msra.mxu0 %v583
        %729 = vmatpush.msra.mxu0 %v581
        %730 = vmatpush.msra.mxu0 %v579
        %731 = vmatpush.msra.mxu0 %v544
        %732 = vmatpush.msra.mxu0 %v542
        %733 = vmatpush.msra.mxu0 %v540
        %734 = vmatpush.msra.mxu0 %v538
        %735 = vmatpush.msra.mxu0 %v331
        %736 = vmatpush.msra.mxu0 %v329
        %737 = vmatpush.msra.mxu0 %v327
        %738 = vmatpush.msra.mxu0 %v325
        %739 = vmatmul.f32.gmra.mxu0 %v294
        %v740 = vpop.f32.mrf.mxu0
        %v741 = vadd.f32 %v712, %v740
        %742 = vmatmul.f32.gmra.mxu0 %v297
        %v743 = vpop.f32.mrf.mxu0
        %v744 = vadd.f32 %v715, %v743
        %745 = vmatmul.f32.gmra.mxu0 %v300
        %v746 = vpop.f32.mrf.mxu0
        %v747 = vadd.f32 %v718, %v746
        %748 = vmatmul.f32.gmra.mxu0 %v303
        %v749 = vpop.f32.mrf.mxu0
        %v750 = vadd.f32 %v721, %v749
        %751 = vdwg.mxu0
        %752 = vmatpush.msra.mxu0 0.0
        %753 = vmatpush.msra.mxu0 0.0
        %754 = vmatpush.msra.mxu0 0.0
        %755 = vmatpush.msra.mxu0 0.0
        %756 = vmatpush.msra.mxu0 0.0
        %757 = vmatpush.msra.mxu0 0.0
        %758 = vmatpush.msra.mxu0 0.0
        %759 = vmatpush.msra.mxu0 0.0
        %760 = vmatpush.msra.mxu0 0.0
        %761 = vmatpush.msra.mxu0 0.0
        %762 = vmatpush.msra.mxu0 0.0
        %763 = vmatpush.msra.mxu0 0.0
        %764 = vmatpush.msra.mxu0 %v659
        %765 = vmatpush.msra.mxu0 %v657
        %766 = vmatpush.msra.mxu0 %v655
        %767 = vmatpush.msra.mxu0 %v653
        %768 = vmatmul.f32.gmra.mxu0 %v683
        %v769 = vpop.f32.mrf.mxu0
        %v770 = vadd.f32 %v741, %v769
        %771 = vmatmul.f32.gmra.mxu0 %v686
        %v772 = vpop.f32.mrf.mxu0
        %v773 = vadd.f32 %v744, %v772
        %774 = vmatmul.f32.gmra.mxu0 %v689
        %v775 = vpop.f32.mrf.mxu0
        %v776 = vadd.f32 %v747, %v775
        %777 = vmatmul.f32.gmra.mxu0 %v692
        %v778 = vpop.f32.mrf.mxu0
        %v779 = vadd.f32 %v750, %v778
        %780 = vdwg.mxu0
        %781 = vmatpush.msra.mxu0 %v504
        %782 = vmatpush.msra.mxu0 %v502
        %783 = vmatpush.msra.mxu0 %v500
        %784 = vmatpush.msra.mxu0 %v498
        %785 = vmatpush.msra.mxu0 %v463
        %786 = vmatpush.msra.mxu0 %v461
        %787 = vmatpush.msra.mxu0 %v459
        %788 = vmatpush.msra.mxu0 %v457
        %789 = vmatpush.msra.mxu0 %v406
        %790 = vmatpush.msra.mxu0 %v405
        %791 = vmatpush.msra.mxu0 %v404
        %792 = vmatpush.msra.mxu0 %v403
        %793 = vmatpush.msra.mxu0 %v385
        %794 = vmatpush.msra.mxu0 %v383
        %795 = vmatpush.msra.mxu0 %v381
        %796 = vmatpush.msra.mxu0 %v379
        %797 = vmatmul.f32.gmra.mxu0 %v293
        %v798 = vpop.f32.mrf.mxu0
        %v799 = vadd.f32 %v664, %v798
        %800 = vmatmul.f32.gmra.mxu0 %v296
        %v801 = vpop.f32.mrf.mxu0
        %v802 = vadd.f32 %v669, %v801
        %803 = vmatmul.f32.gmra.mxu0 %v299
        %v804 = vpop.f32.mrf.mxu0
        %v805 = vadd.f32 %v674, %v804
        %806 = vmatmul.f32.gmra.mxu0 %v302
        %v807 = vpop.f32.mrf.mxu0
        %v808 = vadd.f32 %v679, %v807
        %809 = vdwg.mxu0
        %810 = vmatpush.msra.mxu0 %v619
        %811 = vmatpush.msra.mxu0 %v618
        %812 = vmatpush.msra.mxu0 %v617
        %813 = vmatpush.msra.mxu0 %v616
        %814 = vmatpush.msra.mxu0 %v586
        %815 = vmatpush.msra.mxu0 %v584
        %816 = vmatpush.msra.mxu0 %v582
        %817 = vmatpush.msra.mxu0 %v580
        %818 = vmatpush.msra.mxu0 %v545
        %819 = vmatpush.msra.mxu0 %v543
        %820 = vmatpush.msra.mxu0 %v541
        %821 = vmatpush.msra.mxu0 %v539
        %822 = vmatpush.msra.mxu0 %v332
        %823 = vmatpush.msra.mxu0 %v330
        %824 = vmatpush.msra.mxu0 %v328
        %825 = vmatpush.msra.mxu0 %v326
        %826 = vmatmul.f32.gmra.mxu0 %v294
        %v827 = vpop.f32.mrf.mxu0
        %v828 = vadd.f32 %v799, %v827
        %829 = vmatmul.f32.gmra.mxu0 %v297
        %v830 = vpop.f32.mrf.mxu0
        %v831 = vadd.f32 %v802, %v830
        %832 = vmatmul.f32.gmra.mxu0 %v300
        %v833 = vpop.f32.mrf.mxu0
        %v834 = vadd.f32 %v805, %v833
        %835 = vmatmul.f32.gmra.mxu0 %v303
        %v836 = vpop.f32.mrf.mxu0
        %v837 = vadd.f32 %v808, %v836
        %838 = vdwg.mxu0
        %839 = vmatpush.msra.mxu0 0.0
        %840 = vmatpush.msra.mxu0 0.0
        %841 = vmatpush.msra.mxu0 0.0
        %842 = vmatpush.msra.mxu0 0.0
        %843 = vmatpush.msra.mxu0 0.0
        %844 = vmatpush.msra.mxu0 0.0
        %845 = vmatpush.msra.mxu0 0.0
        %846 = vmatpush.msra.mxu0 0.0
        %847 = vmatpush.msra.mxu0 0.0
        %848 = vmatpush.msra.mxu0 0.0
        %849 = vmatpush.msra.mxu0 0.0
        %850 = vmatpush.msra.mxu0 0.0
        %851 = vmatpush.msra.mxu0 %v660
        %852 = vmatpush.msra.mxu0 %v658
        %853 = vmatpush.msra.mxu0 %v656
        %854 = vmatpush.msra.mxu0 %v654
        %855 = vmatmul.f32.gmra.mxu0 %v683
        %v856 = vpop.f32.mrf.mxu0
        %v857 = vadd.f32 %v828, %v856
        %858 = vmatmul.f32.gmra.mxu0 %v686
        %v859 = vpop.f32.mrf.mxu0
        %v860 = vadd.f32 %v831, %v859
        %861 = vmatmul.f32.gmra.mxu0 %v689
        %v862 = vpop.f32.mrf.mxu0
        %v863 = vadd.f32 %v834, %v862
        %864 = vmatmul.f32.gmra.mxu0 %v692
        %v865 = vpop.f32.mrf.mxu0
        %v866 = vadd.f32 %v837, %v865
        %867 = vdwg.mxu0
        %v868 = vmax.f32 %v770, 0.0
        %v869 = vmax.f32 %v857, 0.0
        %v870 = vmax.f32 %v773, 0.0
        %v871 = vmax.f32 %v860, 0.0
        %v872 = vmax.f32 %v776, 0.0
        %v873 = vmax.f32 %v863, 0.0
        %v874 = vmax.f32 %v779, 0.0
        %v875 = vmax.f32 %v866, 0.0
        %877 = vset.pattern.permute.xlu0 0
        %878 = vperm.xlu0 %877, %v313
        %v879 = vpop.permute.xlu0 %878
        %882 = vset.pattern.permute.xlu0 0
        %883 = vperm.xlu0 %882, %v314
        %v884 = vpop.permute.xlu0 %883
        %887 = vset.pattern.permute.xlu0 0
        %888 = vperm.xlu0 %887, %v315
        %v889 = vpop.permute.xlu0 %888
        %892 = vset.pattern.permute.xlu0 0
        %893 = vperm.xlu0 %892, %v316
        %v894 = vpop.permute.xlu0 %893
        %v897 = vsel %vm681, %v305, 0
        %v900 = vsel %vm681, %v306, 0
        %v903 = vsel %vm681, %v307, 0
        %v906 = vsel %vm681, %v308, 0
        %908 = vmatpush.msra.mxu0 0.0
        %909 = vmatpush.msra.mxu0 0.0
        %910 = vmatpush.msra.mxu0 0.0
        %911 = vmatpush.msra.mxu0 0.0
        %912 = vmatpush.msra.mxu0 0.0
        %913 = vmatpush.msra.mxu0 0.0
        %914 = vmatpush.msra.mxu0 0.0
        %915 = vmatpush.msra.mxu0 0.0
        %916 = vmatpush.msra.mxu0 0.0
        %917 = vmatpush.msra.mxu0 0.0
        %918 = vmatpush.msra.mxu0 0.0
        %919 = vmatpush.msra.mxu0 0.0
        %920 = vmatpush.msra.mxu0 %v874
        %921 = vmatpush.msra.mxu0 %v872
        %922 = vmatpush.msra.mxu0 %v870
        %923 = vmatpush.msra.mxu0 %v868
        %924 = vmatmul.f32.gmra.mxu0 %v897
        %v925 = vpop.f32.mrf.mxu0
        %v926 = vadd.f32 %v879, %v925
        %927 = vmatmul.f32.gmra.mxu0 %v900
        %v928 = vpop.f32.mrf.mxu0
        %v929 = vadd.f32 %v884, %v928
        %930 = vmatmul.f32.gmra.mxu0 %v903
        %v931 = vpop.f32.mrf.mxu0
        %v932 = vadd.f32 %v889, %v931
        %933 = vmatmul.f32.gmra.mxu0 %v906
        %v934 = vpop.f32.mrf.mxu0
        %v935 = vadd.f32 %v894, %v934
        %936 = vdwg.mxu0
        %937 = vmatpush.msra.mxu0 0.0
        %938 = vmatpush.msra.mxu0 0.0
        %939 = vmatpush.msra.mxu0 0.0
        %940 = vmatpush.msra.mxu0 0.0
        %941 = vmatpush.msra.mxu0 0.0
        %942 = vmatpush.msra.mxu0 0.0
        %943 = vmatpush.msra.mxu0 0.0
        %944 = vmatpush.msra.mxu0 0.0
        %945 = vmatpush.msra.mxu0 0.0
        %946 = vmatpush.msra.mxu0 0.0
        %947 = vmatpush.msra.mxu0 0.0
        %948 = vmatpush.msra.mxu0 0.0
        %949 = vmatpush.msra.mxu0 %v875
        %950 = vmatpush.msra.mxu0 %v873
        %951 = vmatpush.msra.mxu0 %v871
        %952 = vmatpush.msra.mxu0 %v869
        %953 = vmatmul.f32.gmra.mxu0 %v897
        %v954 = vpop.f32.mrf.mxu0
        %v955 = vadd.f32 %v879, %v954
        %956 = vmatmul.f32.gmra.mxu0 %v900
        %v957 = vpop.f32.mrf.mxu0
        %v958 = vadd.f32 %v884, %v957
        %959 = vmatmul.f32.gmra.mxu0 %v903
        %v960 = vpop.f32.mrf.mxu0
        %v961 = vadd.f32 %v889, %v960
        %962 = vmatmul.f32.gmra.mxu0 %v906
        %v963 = vpop.f32.mrf.mxu0
        %v964 = vadd.f32 %v894, %v963
        %965 = vdwg.mxu0
        %v966 = vadd.f32 %v317, %v926
        %v967 = vadd.f32 %v318, %v955
        %v968 = vadd.f32 %v319, %v929
        %v969 = vadd.f32 %v320, %v958
        %v970 = vadd.f32 %v321, %v932
        %v971 = vadd.f32 %v322, %v961
        %v972 = vadd.f32 %v323, %v935
        %v973 = vadd.f32 %v324, %v964
        %974 = vst [vmem:[%s261] sm:$0xff] %v966
        %975 = vst [vmem:[%s261 + $0x8] sm:$0xff] %v967
        %976 = vst [vmem:[%s261 + $0x10] sm:$0xff] %v968
        %977 = vst [vmem:[%s261 + $0x18] sm:$0xff] %v969
        %978 = vst [vmem:[%s261 + $0x20] sm:$0xff] %v970
        %979 = vst [vmem:[%s261 + $0x28] sm:$0xff] %v971
        %980 = vst [vmem:[%s261 + $0x30] sm:$0xff] %v972
        %981 = vst [vmem:[%s261 + $0x38] sm:$0xff] %v973
        %s982 = sand.u32 %s141, 1
        %s983 = scalar_lea.sflag [#allocation4], %s982
        %s984 = sand.u32 %s141, 1
        %s985 = smul.addr %s984, 64
        %s986 = scalar_lea.vmem [#allocation7], %s985
        // Predicated region
        $region49: #{tpu_custom_call.1} parent=39 // pred_check
          %p987 = pneg %p151
        $region50: #{tpu_custom_call.1} parent=39 // pred_check_branch
          %989 = sbr.rel (%p987) target = $region52
        $region51: #{tpu_custom_call.1} parent=39 // pred_region
          %991 = vsyncadd %s983, 0
          %s992 = smul.addr %s23, 8
          %s993 = smul.addr %s992, 8
          %s994 = scalar_lea.hbm %s5, %s993
          %s995 = sshll.u32 %s986, 4
          %s996 = int_to_ptr.vmem [resolvable:$true] %s995
          %s997 = sshll.u32 %s994, 4
          %s998 = int_to_ptr.hbm [resolvable:$true] %s997
          %1003 = dma.vmem_to_hbm [thread:$0]  %s996, 1024, %s998, %s983, 256, 256, 16
        $region52: #{tpu_custom_call.1} parent=39 // pred_fallthru
          _
      $region40: #{tpu_custom_call.1} parent=5 // pred_fallthru
        _
      %p1004 = scmp.le.s32.totalorder 2, %s18
      // Predicated region
      $region53: #{tpu_custom_call.1} parent=5 // pred_check
        %p1005 = pneg %p1004
      $region54: #{tpu_custom_call.1} parent=5 // pred_check_branch
        %1007 = sbr.rel (%p1005) target = $region56
      $region55: #{tpu_custom_call.1} parent=5 // pred_region
        %s1008 = ssub.s32 %s18, 2
        // Predicated region
        $region57: #{tpu_custom_call.1} parent=55 // pred_check
          %p1009 = pneg %p157
        $region58: #{tpu_custom_call.1} parent=55 // pred_check_branch
          %1011 = sbr.rel (%p1009) target = $region60
        $region59: #{tpu_custom_call.1} parent=55 // pred_region
          %s1012 = sand.u32 %s142, 1
          %s1013 = scalar_lea.sflag [#allocation4], %s1012
          %s1014 = sand.u32 %s142, 1
          %s1015 = smul.addr %s1014, 64
          %s1016 = scalar_lea.vmem [#allocation7], %s1015
          %1018 = dma.done %s1013, 1024
        $region60: #{tpu_custom_call.1} parent=55 // pred_fallthru
          _
      $region56: #{tpu_custom_call.1} parent=5 // pred_fallthru
        _
    $region6: #{tpu_custom_call.1} parent=1 // loop_footer
      %s22 = sadd.s32 1, %s18
    $region7: #{tpu_custom_call.1} parent=1 // loop_footer_branch
      %17 = sbr.rel target = $region3
    $region8: #{tpu_custom_call.1} parent=1 // loop_exit
      _
    %1019 = vsyncpa [#allocation3], 1
    %s1020 = scalar_lea.sflag [#allocation3], 1
    %1021 = vsyncpa %s1020, 1
    %1022 = vsyncpa [#allocation6], 1
    %1023 = vsyncpa [#allocation4], 1
    %s1024 = scalar_lea.sflag [#allocation4], 1
    %1025 = vsyncpa %s1024, 1

</llo_original>
